<compile_context>
chip_gen: v5e
topology: v5e:2x2
jax: 0.10.0
libtpu: 0.0.40
codegen_flags: <defaults>
</compile_context>

<pallas_src>
import functools

import jax
import jax.numpy as jnp
from jax.experimental import pallas as pl
from jax.experimental.pallas import tpu as pltpu


def _round_up(n, m):
    return (n + m - 1) // m * m


def _choose_tb(B, tb=None):
    """Batch tile: multiple of 32, <= 4096; for large batches aim for >= 4 grid
    steps so both v7x TensorCores get >= 2 pipelined steps each."""
    B_r = _round_up(B, 32)
    if tb is not None:
        return min(_round_up(tb, 32), B_r)
    if B_r <= 1024:
        return B_r                      # small batch: single lane-dense tile
    n_steps = max(4, -(-B_r // 4096))   # >= 4 steps, tile capped at 4096
    return min(4096, _round_up(-(-B_r // n_steps), 32))


def policy_net_kernel(action_size, x_ref, w1_ref, b1_ref, w2_ref, b2_ref,
                      w34_ref, b34_ref, *rest):
    """Fused fc1->relu->fc2->relu->(fc3|fc4) with in-kernel masked softmax.

    Output slab (lane-dense, 128-wide): softmax probs in columns [0, action_size),
    the raw fc4 value in column `action_size`.  Accumulation is f32; the cast to
    the output dtype happens only at the final store.
    """
    if len(rest) == 2:
        mask_ref, out_ref = rest
    else:
        mask_ref, (out_ref,) = None, rest

    # fc1 + relu (normalization (x-center)/scale already folded into w1/b1)
    h = jnp.dot(x_ref[...], w1_ref[...],
                preferred_element_type=jnp.float32) + b1_ref[...]
    h = jnp.maximum(h, 0.0)

    # fc2 + relu
    h = jnp.dot(h.astype(w2_ref.dtype), w2_ref[...],
                preferred_element_type=jnp.float32) + b2_ref[...]
    h = jnp.maximum(h, 0.0)

    # fused fc3|fc4 head: one matmul with a lane-dense (128-wide) output
    y = jnp.dot(h.astype(w34_ref.dtype), w34_ref[...],
                preferred_element_type=jnp.float32) + b34_ref[...]

    # Knock out padded + value columns for the softmax in-kernel (no mask DMA
    # needed for that); the optional actions mask is streamed as bf16.
    col = jax.lax.broadcasted_iota(jnp.int32, y.shape, 1)
    logits = jnp.where(col < action_size, y, -1e9)
    if mask_ref is not None:
        logits = logits + mask_ref[...].astype(jnp.float32)

    logits = logits - jnp.max(logits, axis=-1, keepdims=True)
    e = jnp.exp(logits)
    # approx=True routes the divide to the EUP slot (~1e-3 rel error on probs).
    probs = e * pl.reciprocal(jnp.sum(e, axis=-1, keepdims=True), approx=True)

    # Single lane-dense output slab: probs in cols < A, raw value in col A.
    out_ref[...] = jnp.where(col == action_size, y, probs).astype(out_ref.dtype)


def prepare_params(params, action_size, dtype=jnp.bfloat16):
    """One-time parameter prep: fold (x-center)/scale into fc1, fuse fc3|fc4 into
    one lane-dense [H, A_pad] head, cast matmul weights to `dtype` (bf16 default,
    native for v6e/v7x MXU).  Biases stay f32; accumulation in-kernel is f32."""
    S, H = params["w1"].shape
    A = action_size
    A_pad = max(128, _round_up(A + 1, 128))

    inv_scale = 1.0 / params["scale"].astype(jnp.float32)
    w1f = (params["w1"].astype(jnp.float32) * inv_scale[:, None]).astype(dtype)
    # Fold the centering through the *cast* weight so the bf16 path matches the
    # kernel math:  ((x-center)/scale) @ w1 + b1 == x @ w1f + (b1 - center @ w1f).
    b1f = (params["b1"].astype(jnp.float32)
           - params["center"].astype(jnp.float32) @ w1f.astype(jnp.float32))
    b1f = b1f.reshape(1, H)

    w2 = params["w2"].astype(dtype)
    b2 = params["b2"].astype(jnp.float32).reshape(1, H)

    w34 = jnp.zeros((H, A_pad), dtype)
    w34 = w34.at[:, :A].set(params["w3"].astype(dtype))
    w34 = w34.at[:, A:A + 1].set(params["w4"].astype(dtype))
    b34 = jnp.zeros((1, A_pad), jnp.float32)
    b34 = b34.at[0, :A].set(params["b3"].astype(jnp.float32))
    b34 = b34.at[0, A].set(params["b4"].astype(jnp.float32)[0])

    return dict(w1=w1f, b1=b1f, w2=w2, b2=b2, w34=w34, b34=b34,
                A=A, A_pad=A_pad, S=S, H=H, dtype=dtype)


@functools.partial(
    jax.jit,
    static_argnames=("A", "A_pad", "TB", "w_dtype", "out_dtype", "return_slab"))
def _forward_impl(x, w1, b1, w2, b2, w34, b34, actions_mask,
                  *, A, A_pad, TB, w_dtype, out_dtype, return_slab):
    B, S = x.shape
    H = w1.shape[1]
    B_pad = _round_up(B, TB)

    # Cast + pad in one fused pass (inside this jit); no pad at all if aligned.
    x_p = x.astype(w_dtype)
    if B_pad != B:
        x_p = jnp.pad(x_p, ((0, B_pad - B), (0, 0)))

    resident = lambda shape: pl.BlockSpec(shape, lambda i: (0, 0))
    in_specs = [
        pl.BlockSpec((TB, S), lambda i: (i, 0)),   # x (tiled over batch)
        resident((S, H)),                          # w1 (norm folded)
        resident((1, H)),                          # b1
        resident((H, H)),                          # w2
        resident((1, H)),                          # b2
        resident((H, A_pad)),                      # fused w3|w4 (padded)
        resident((1, A_pad)),                      # fused b3|b4 (padded)
    ]
    operands = [x_p, w1, b1, w2, b2, w34, b34]

    if actions_mask is not None:
        # bf16 additive mask slab: half the HBM bytes of an f32 slab; padded and
        # value columns are handled in-kernel via the iota, so they stay 0 here.
        mask = jnp.zeros((B_pad, A_pad), jnp.bfloat16)
        mask = mask.at[:B, :A].set(actions_mask.astype(jnp.bfloat16))
        in_specs.append(pl.BlockSpec((TB, A_pad), lambda i: (i, 0)))
        operands.append(mask)

    out = pl.pallas_call(
        functools.partial(policy_net_kernel, A),
        out_shape=jax.ShapeDtypeStruct((B_pad, A_pad), out_dtype),
        grid=(B_pad // TB,),
        in_specs=in_specs,
        out_specs=pl.BlockSpec((TB, A_pad), lambda i: (i, 0)),
        compiler_params=pltpu.CompilerParams(
            dimension_semantics=("parallel",),
            # VMEM footprint stays ~7 MB even at TB=4096 with bf16 streams, so the
            # default scoped limit (16 MiB on v5e, 32 MiB on v6e/v7x) is ample.
        ),
    )(*operands)

    if return_slab:
        return out
    # Slices live inside this jit so they fuse instead of re-reading the slab
    # as standalone XLA ops.
    probs = out[:B, :A]
    vals = out[:B, A:A + 1]
    return probs, vals


def policy_net_forward(x, prep, actions_mask=None, *, tb=None,
                       out_dtype=jnp.float32, return_slab=False):
    """x: [B, state_size] float32.  prep: output of prepare_params.

    Returns (probs [B, A], vals [B, 1]) in `out_dtype`, or the raw lane-dense
    [B_pad, A_pad] slab if return_slab=True (probs in cols [0, A), value in col A).
    """
    TB = _choose_tb(x.shape[0], tb)
    return _forward_impl(
        x, prep["w1"], prep["b1"], prep["w2"], prep["b2"],
        prep["w34"], prep["b34"], actions_mask,
        A=prep["A"], A_pad=prep["A_pad"], TB=TB,
        w_dtype=prep["dtype"], out_dtype=out_dtype, return_slab=return_slab)


def init_params(key, state_size, action_size, hidden=128):
    """Deterministic synthetic parameters (PyTorch Linear init, stored as [in, out])."""
    ks = jax.random.split(key, 8)

    def linear(kw, kb, fan_in, fan_out):
        bound = 1.0 / jnp.sqrt(fan_in)
        w = jax.random.uniform(kw, (fan_in, fan_out), jnp.float32, -bound, bound)
        b = jax.random.uniform(kb, (fan_out,), jnp.float32, -bound, bound)
        return w, b

    w1, b1 = linear(ks[0], ks[1], state_size, hidden)
    w2, b2 = linear(ks[2], ks[3], hidden, hidden)
    w3, b3 = linear(ks[4], ks[5], hidden, action_size)
    w4, b4 = linear(ks[6], ks[7], hidden, 1)
    return dict(
        center=jnp.zeros((state_size,), jnp.float32),
        scale=jnp.ones((state_size,), jnp.float32),
        w1=w1, b1=b1, w2=w2, b2=b2, w3=w3, b3=b3, w4=w4, b4=b4,
    )


def _reference_forward(x, params, actions_mask=None):
    """Pure-JAX reference mirroring the PyTorch module."""
    z = (x - params["center"][None, :]) / params["scale"][None, :]
    h = jax.nn.relu(z @ params["w1"] + params["b1"])
    h = jax.nn.relu(h @ params["w2"] + params["b2"])
    logits = h @ params["w3"] + params["b3"]
    if actions_mask is not None:
        logits = logits + actions_mask
    probs = jax.nn.softmax(logits, axis=-1)
    vals = h @ params["w4"] + params["b4"]
    return probs, vals


if __name__ == "__main__":
    key = jax.random.PRNGKey(0)
    k_x, k_p, k_m = jax.random.split(key, 3)

    batch, state_size, action_size = 96, 32, 16
    x = jax.random.normal(k_x, (batch, state_size), jnp.float32)
    params = init_params(k_p, state_size, action_size)

    mask_bits = jax.random.bernoulli(k_m, 0.8, (batch, action_size))
    actions_mask = jnp.where(mask_bits, 0.0, -1e9).astype(jnp.float32)

    # --- f32 weights, masked, multi-tile grid (TB=32 -> grid=(3,)) ---
    prep_f32 = prepare_params(params, action_size, dtype=jnp.float32)
    probs, vals = policy_net_forward(x, prep_f32, actions_mask, tb=32)
    jax.block_until_ready((probs, vals))
    probs_ref, vals_ref = _reference_forward(x, params, actions_mask)
    assert probs.shape == (batch, action_size) and vals.shape == (batch, 1)
    # approx reciprocal => ~1e-3 relative error on the probabilities
    assert jnp.allclose(probs, probs_ref, atol=2e-3, rtol=2e-3)
    assert jnp.allclose(vals, vals_ref, atol=1e-4, rtol=1e-4)
    assert jnp.allclose(jnp.sum(probs, axis=-1), 1.0, atol=5e-3)

    # --- no-mask path: mask operand dropped entirely, single tile ---
    probs2, vals2 = policy_net_forward(x, prep_f32, None)
    jax.block_until_ready((probs2, vals2))
    probs2_ref, vals2_ref = _reference_forward(x, params, None)
    assert jnp.allclose(probs2, probs2_ref, atol=2e-3, rtol=2e-3)
    assert jnp.allclose(vals2, vals2_ref, atol=1e-4, rtol=1e-4)

    # --- non-trivial normalization constants (validates the w1/b1 fold) ---
    params_n = dict(params)
    params_n["center"] = jax.random.normal(jax.random.PRNGKey(1),
                                           (state_size,), jnp.float32)
    params_n["scale"] = 0.5 + jax.random.uniform(jax.random.PRNGKey(2),
                                                 (state_size,), jnp.float32)
    prep_n = prepare_params(params_n, action_size, dtype=jnp.float32)
    probs3, vals3 = policy_net_forward(x, prep_n, actions_mask, tb=32)
    jax.block_until_ready((probs3, vals3))
    probs3_ref, vals3_ref = _reference_forward(x, params_n, actions_mask)
    assert jnp.allclose(probs3, probs3_ref, atol=2e-3, rtol=2e-3)
    assert jnp.allclose(vals3, vals3_ref, atol=1e-3, rtol=1e-3)

    # --- bf16 weights (default) + bf16 output slab: v6e/v7x MXU-native, min-bytes path ---
    prep_bf16 = prepare_params(params, action_size)   # dtype=bf16 default
    probs4, vals4 = policy_net_forward(x, prep_bf16, actions_mask, tb=32,
                                       out_dtype=jnp.bfloat16)
    jax.block_until_ready((probs4, vals4))
    assert probs4.dtype == jnp.bfloat16 and vals4.dtype == jnp.bfloat16
    assert bool(jnp.all(jnp.isfinite(probs4.astype(jnp.float32))))
    assert bool(jnp.all(jnp.isfinite(vals4.astype(jnp.float32))))
    assert jnp.allclose(probs4.astype(jnp.float32), probs_ref, atol=6e-2)
    assert jnp.allclose(vals4.astype(jnp.float32), vals_ref, atol=6e-2)
    assert jnp.allclose(jnp.sum(probs4.astype(jnp.float32), axis=-1), 1.0, atol=2e-2)

    # --- deferred-slicing path: raw lane-dense slab for downstream fusion ---
    slab = policy_net_forward(x, prep_f32, actions_mask, tb=32, return_slab=True)
    jax.block_until_ready(slab)
    assert slab.shape == (96, 128)
    assert jnp.allclose(slab[:batch, :action_size], probs, atol=1e-6)

    print("KERNEL_OK")
</pallas_src>

<mosaic_0001>
module attributes {stable_mosaic.version = 11 : i64} {
  func.func @policy_net_kernel(%arg0: i32, %arg1: memref<32x32xf32, #tpu.memory_space<vmem>>, %arg2: memref<32x128xf32, #tpu.memory_space<vmem>>, %arg3: memref<1x128xf32, #tpu.memory_space<vmem>>, %arg4: memref<128x128xf32, #tpu.memory_space<vmem>>, %arg5: memref<1x128xf32, #tpu.memory_space<vmem>>, %arg6: memref<128x128xf32, #tpu.memory_space<vmem>>, %arg7: memref<1x128xf32, #tpu.memory_space<vmem>>, %arg8: memref<32x128xbf16, #tpu.memory_space<vmem>>, %arg9: memref<32x128xf32, #tpu.memory_space<vmem>>) attributes {dimension_semantics = [#tpu.dimension_semantics<parallel>], iteration_bounds = array<i64: 3>, scalar_prefetch = 0 : i64, scratch_operands = 0 : i64, tpu.core_type = #tpu.core_type<tc>, window_params = [{transform_indices = @transform_0, window_bounds = array<i64: 32, 32>}, {pipeline_mode = #tpu.pipeline_mode<synchronous>, transform_indices = @transform_1, window_bounds = array<i64: 32, 128>}, {pipeline_mode = #tpu.pipeline_mode<synchronous>, transform_indices = @transform_2, window_bounds = array<i64: 1, 128>}, {pipeline_mode = #tpu.pipeline_mode<synchronous>, transform_indices = @transform_3, window_bounds = array<i64: 128, 128>}, {pipeline_mode = #tpu.pipeline_mode<synchronous>, transform_indices = @transform_4, window_bounds = array<i64: 1, 128>}, {pipeline_mode = #tpu.pipeline_mode<synchronous>, transform_indices = @transform_5, window_bounds = array<i64: 128, 128>}, {pipeline_mode = #tpu.pipeline_mode<synchronous>, transform_indices = @transform_6, window_bounds = array<i64: 1, 128>}, {transform_indices = @transform_7, window_bounds = array<i64: 32, 128>}, {transform_indices = @transform_8, window_bounds = array<i64: 32, 128>}]} {
    %c0 = arith.constant 0 : index
    %c0_0 = arith.constant 0 : index
    %0 = vector.load %arg1[%c0, %c0_0] : memref<32x32xf32, #tpu.memory_space<vmem>>, vector<32x32xf32>
    %c0_1 = arith.constant 0 : index
    %c0_2 = arith.constant 0 : index
    %1 = vector.load %arg2[%c0_1, %c0_2] : memref<32x128xf32, #tpu.memory_space<vmem>>, vector<32x128xf32>
    %cst = arith.constant dense<0.000000e+00> : vector<32x128xf32>
    %2 = tpu.matmul %0, %1, %cst {dimension_numbers = #tpu.dot_dimension_numbers<[1], [0], [0], [1], [0, 0, 1, 1], [], []>} : vector<32x32xf32>, vector<32x128xf32>, vector<32x128xf32> -> vector<32x128xf32>
    %c0_3 = arith.constant 0 : index
    %c0_4 = arith.constant 0 : index
    %3 = vector.load %arg3[%c0_3, %c0_4] : memref<1x128xf32, #tpu.memory_space<vmem>>, vector<1x128xf32>
    %4 = vector.broadcast %3 : vector<1x128xf32> to vector<32x128xf32>
    %5 = arith.addf %2, %4 : vector<32x128xf32>
    %cst_5 = arith.constant 0.000000e+00 : f32
    %6 = vector.broadcast %cst_5 : f32 to vector<32x128xf32>
    %7 = arith.maximumf %5, %6 : vector<32x128xf32>
    %c0_6 = arith.constant 0 : index
    %c0_7 = arith.constant 0 : index
    %8 = vector.load %arg4[%c0_6, %c0_7] : memref<128x128xf32, #tpu.memory_space<vmem>>, vector<128x128xf32>
    %cst_8 = arith.constant dense<0.000000e+00> : vector<32x128xf32>
    %9 = tpu.matmul %7, %8, %cst_8 {dimension_numbers = #tpu.dot_dimension_numbers<[1], [0], [0], [1], [0, 0, 1, 1], [], []>} : vector<32x128xf32>, vector<128x128xf32>, vector<32x128xf32> -> vector<32x128xf32>
    %c0_9 = arith.constant 0 : index
    %c0_10 = arith.constant 0 : index
    %10 = vector.load %arg5[%c0_9, %c0_10] : memref<1x128xf32, #tpu.memory_space<vmem>>, vector<1x128xf32>
    %11 = vector.broadcast %10 : vector<1x128xf32> to vector<32x128xf32>
    %12 = arith.addf %9, %11 : vector<32x128xf32>
    %cst_11 = arith.constant 0.000000e+00 : f32
    %13 = vector.broadcast %cst_11 : f32 to vector<32x128xf32>
    %14 = arith.maximumf %12, %13 : vector<32x128xf32>
    %c0_12 = arith.constant 0 : index
    %c0_13 = arith.constant 0 : index
    %15 = vector.load %arg6[%c0_12, %c0_13] : memref<128x128xf32, #tpu.memory_space<vmem>>, vector<128x128xf32>
    %cst_14 = arith.constant dense<0.000000e+00> : vector<32x128xf32>
    %16 = tpu.matmul %14, %15, %cst_14 {dimension_numbers = #tpu.dot_dimension_numbers<[1], [0], [0], [1], [0, 0, 1, 1], [], []>} : vector<32x128xf32>, vector<128x128xf32>, vector<32x128xf32> -> vector<32x128xf32>
    %c0_15 = arith.constant 0 : index
    %c0_16 = arith.constant 0 : index
    %17 = vector.load %arg7[%c0_15, %c0_16] : memref<1x128xf32, #tpu.memory_space<vmem>>, vector<1x128xf32>
    %18 = vector.broadcast %17 : vector<1x128xf32> to vector<32x128xf32>
    %19 = arith.addf %16, %18 : vector<32x128xf32>
    %20 = tpu.iota {dimensions = array<i32: 1>} : vector<32x128xi32>
    %c16_i32 = arith.constant 16 : i32
    %21 = vector.broadcast %c16_i32 : i32 to vector<32x128xi32>
    %22 = arith.cmpi slt, %20, %21 : vector<32x128xi32>
    %cst_17 = arith.constant -1.000000e+09 : f32
    %23 = vector.broadcast %cst_17 : f32 to vector<32x128xf32>
    %24 = arith.select %22, %19, %23 : vector<32x128xi1>, vector<32x128xf32>
    %c0_18 = arith.constant 0 : index
    %c0_19 = arith.constant 0 : index
    %25 = vector.load %arg8[%c0_18, %c0_19] : memref<32x128xbf16, #tpu.memory_space<vmem>>, vector<32x128xbf16>
    %26 = arith.extf %25 : vector<32x128xbf16> to vector<32x128xf32>
    %27 = arith.addf %24, %26 : vector<32x128xf32>
    %cst_20 = arith.constant dense<0xFF800000> : vector<32xf32>
    %28 = vector.multi_reduction <maximumf>, %27, %cst_20 [1] : vector<32x128xf32> to vector<32xf32>
    %29 = vector.shape_cast %28 : vector<32xf32> to vector<32x1xf32>
    %30 = vector.broadcast %29 : vector<32x1xf32> to vector<32x128xf32>
    %31 = arith.subf %27, %30 : vector<32x128xf32>
    %32 = math.exp %31 : vector<32x128xf32>
    %cst_21 = arith.constant dense<0.000000e+00> : vector<32xf32>
    %33 = vector.multi_reduction <add>, %32, %cst_21 [1] : vector<32x128xf32> to vector<32xf32>
    %34 = vector.shape_cast %33 : vector<32xf32> to vector<32x1xf32>
    %35 = tpu.reciprocal %34 {approx = true} : vector<32x1xf32> -> vector<32x1xf32>
    %36 = vector.broadcast %35 : vector<32x1xf32> to vector<32x128xf32>
    %37 = arith.mulf %32, %36 : vector<32x128xf32>
    %c16_i32_22 = arith.constant 16 : i32
    %38 = vector.broadcast %c16_i32_22 : i32 to vector<32x128xi32>
    %39 = arith.cmpi eq, %20, %38 : vector<32x128xi32>
    %40 = arith.select %39, %19, %37 : vector<32x128xi1>, vector<32x128xf32>
    %c0_23 = arith.constant 0 : index
    %c0_24 = arith.constant 0 : index
    %41 = vector.load %arg9[%c0_23, %c0_24] : memref<32x128xf32, #tpu.memory_space<vmem>>, vector<32x128xf32>
    tpu.vector_store %arg9[%c0_23, %c0_24], %40 {strides = array<i32>} : memref<32x128xf32, #tpu.memory_space<vmem>>, vector<32x128xf32>,
    return
  }
  func.func @transform_0(%arg0: i32) -> (i32, i32) {
    %c0_i32 = arith.constant 0 : i32
    %c0_i32_0 = arith.constant 0 : i32
    return %arg0, %c0_i32 : i32, i32
  }
  func.func @transform_1(%arg0: i32) -> (i32, i32) {
    %c0_i32 = arith.constant 0 : i32
    %c0_i32_0 = arith.constant 0 : i32
    %c0_i32_1 = arith.constant 0 : i32
    return %c0_i32, %c0_i32_0 : i32, i32
  }
  func.func @transform_2(%arg0: i32) -> (i32, i32) {
    %c0_i32 = arith.constant 0 : i32
    %c0_i32_0 = arith.constant 0 : i32
    %c0_i32_1 = arith.constant 0 : i32
    return %c0_i32, %c0_i32_0 : i32, i32
  }
  func.func @transform_3(%arg0: i32) -> (i32, i32) {
    %c0_i32 = arith.constant 0 : i32
    %c0_i32_0 = arith.constant 0 : i32
    %c0_i32_1 = arith.constant 0 : i32
    return %c0_i32, %c0_i32_0 : i32, i32
  }
  func.func @transform_4(%arg0: i32) -> (i32, i32) {
    %c0_i32 = arith.constant 0 : i32
    %c0_i32_0 = arith.constant 0 : i32
    %c0_i32_1 = arith.constant 0 : i32
    return %c0_i32, %c0_i32_0 : i32, i32
  }
  func.func @transform_5(%arg0: i32) -> (i32, i32) {
    %c0_i32 = arith.constant 0 : i32
    %c0_i32_0 = arith.constant 0 : i32
    %c0_i32_1 = arith.constant 0 : i32
    return %c0_i32, %c0_i32_0 : i32, i32
  }
  func.func @transform_6(%arg0: i32) -> (i32, i32) {
    %c0_i32 = arith.constant 0 : i32
    %c0_i32_0 = arith.constant 0 : i32
    %c0_i32_1 = arith.constant 0 : i32
    return %c0_i32, %c0_i32_0 : i32, i32
  }
  func.func @transform_7(%arg0: i32) -> (i32, i32) {
    %c0_i32 = arith.constant 0 : i32
    %c0_i32_0 = arith.constant 0 : i32
    return %arg0, %c0_i32 : i32, i32
  }
  func.func @transform_8(%arg0: i32) -> (i32, i32) {
    %c0_i32 = arith.constant 0 : i32
    %c0_i32_0 = arith.constant 0 : i32
    return %arg0, %c0_i32 : i32, i32
  }
}

</mosaic_0001>

<llo_original>
// kernel: _forward_impl.1
$region0: #{_forward_impl.1}
  #allocation0 [shape = 'u32[]', space=smem, size = 0x4, offset = 0x4, fixed_abs, tag = 'smem constant byte address 0x4 - core index']
  #allocation1 [shape = 'u32[72,128]{1,0:T(1,128)}', space=vmem, size = 0x9000, scoped, tag = 'internal scratch']
  %s0 = inlined_call_operand.vmem [shape: f32[96,32], index: 0, kind: input, shape index: {}]
  %s1 = inlined_call_operand.vmem [shape: f32[32,128], index: 1, kind: input, shape index: {}]
  %s2 = inlined_call_operand.vmem [shape: f32[1,128], index: 2, kind: input, shape index: {}]
  %s3 = inlined_call_operand.vmem [shape: f32[128,128], index: 3, kind: input, shape index: {}]
  %s4 = inlined_call_operand.vmem [shape: f32[1,128], index: 4, kind: input, shape index: {}]
  %s5 = inlined_call_operand.vmem [shape: f32[128,128], index: 5, kind: input, shape index: {}]
  %s6 = inlined_call_operand.vmem [shape: f32[1,128], index: 6, kind: input, shape index: {}]
  %s7 = inlined_call_operand.vmem [shape: bf16[96,128], index: 7, kind: input, shape index: {}]
  %s8 = inlined_call_operand.vmem [shape: f32[96,128], index: 8, kind: output, shape index: {}]
  %s9 = sld [smem:[#allocation0]]
  $region65: #{_forward_impl.1} parent=0
    _
  %s11 = ssub.s32 1, %s9
  %s12 = scalar_select 0, %s11, %s9
  loop: start=0, step=1, limit=5
  $region2: #{_forward_impl.1} parent=0 // loop_pre_header
    _
  $region3: #{_forward_impl.1} parent=0 // loop_header
    %s14 = sphi 0, %s18
    %p15 = scmp.ge.s32.totalorder %s14, 5
    %s24 = sphi 0, %s26
    %s27 = sphi 0, %s24
    %s28 = sphi 0, %s27
    %s44 = sphi 0, %s28
    %s48 = sphi 0, %s48
    %s50 = sphi 0, %s48
    %s51 = sphi 0, %s50
    %s65 = sphi 0, %s51
    %s69 = sphi 0, %s69
    %s71 = sphi 0, %s69
    %s72 = sphi 0, %s71
    %s86 = sphi 0, %s72
    %s90 = sphi 0, %s90
    %s92 = sphi 0, %s90
    %s93 = sphi 0, %s92
    %s107 = sphi 0, %s93
    %s111 = sphi 0, %s111
    %s113 = sphi 0, %s111
    %s114 = sphi 0, %s113
    %s128 = sphi 0, %s114
    %s132 = sphi 0, %s132
    %s134 = sphi 0, %s132
    %s135 = sphi 0, %s134
    %s149 = sphi 0, %s135
    %s153 = sphi 0, %s153
    %s155 = sphi 0, %s153
    %s156 = sphi 0, %s155
    %s170 = sphi 0, %s156
    %s176 = sphi 0, %s178
    %s179 = sphi 0, %s176
    %s180 = sphi 0, %s179
    %s196 = sphi 0, %s180
    %s202 = sphi 0, %s204
    %s205 = sphi 0, %s202
    %s206 = sphi 0, %s205
    %s222 = sphi 0, %s206
  $region4: #{_forward_impl.1} parent=0 // loop_header_branch
    %17 = sbr.rel (%p15) target = $region8
  $region5: #{_forward_impl.1} parent=0 // loop_body
    %s19 = ssub.s32 %s14, 1
    %s20 = ssub.s32 %s14, 2
    %s21 = sadd.s32 %s14, 1
    %s22 = ssub.s32 %s14, %s21
    %p23 = scmp.eq.s32.totalorder %s22, 0
    %s25 = sadd.s32 %s24, 1
    %s26 = scalar_select %p23, %s24, %s25
    %p29 = pneg %p23
    %p30 = scmp.eq.s32.totalorder %s14, 2
    %p31 = por %p29, %p30
    %p32 = scmp.ne.s32.totalorder %s24, %s27
    %p33 = scmp.eq.s32.totalorder %s14, 0
    %p34 = por %p32, %p33
    %p35 = scmp.ne.s32.totalorder %s24, %s27
    %p36 = scmp.eq.s32.totalorder %s19, 2
    %p37 = por %p35, %p36
    %p38 = scmp.ne.s32.totalorder %s27, %s28
    %p39 = scmp.eq.s32.totalorder %s19, 0
    %p40 = por %p38, %p39
    %p41 = scmp.ne.s32.totalorder %s27, %s28
    %p42 = scmp.eq.s32.totalorder %s20, 2
    %p43 = por %p41, %p42
    %p45 = scmp.ne.s32.totalorder %s28, %s44
    %p46 = scmp.eq.s32.totalorder %s20, 0
    %p47 = por %p45, %p46
    %s49 = sadd.s32 %s48, 1
    %p52 = scmp.eq.s32.totalorder %s14, 2
    %p53 = scmp.ne.s32.totalorder %s48, %s50
    %p54 = scmp.eq.s32.totalorder %s14, 0
    %p55 = por %p53, %p54
    %p56 = scmp.ne.s32.totalorder %s48, %s50
    %p57 = scmp.eq.s32.totalorder %s19, 2
    %p58 = por %p56, %p57
    %p59 = scmp.ne.s32.totalorder %s50, %s51
    %p60 = scmp.eq.s32.totalorder %s19, 0
    %p61 = por %p59, %p60
    %p62 = scmp.ne.s32.totalorder %s50, %s51
    %p63 = scmp.eq.s32.totalorder %s20, 2
    %p64 = por %p62, %p63
    %p66 = scmp.ne.s32.totalorder %s51, %s65
    %p67 = scmp.eq.s32.totalorder %s20, 0
    %p68 = por %p66, %p67
    %s70 = sadd.s32 %s69, 1
    %p73 = scmp.eq.s32.totalorder %s14, 2
    %p74 = scmp.ne.s32.totalorder %s69, %s71
    %p75 = scmp.eq.s32.totalorder %s14, 0
    %p76 = por %p74, %p75
    %p77 = scmp.ne.s32.totalorder %s69, %s71
    %p78 = scmp.eq.s32.totalorder %s19, 2
    %p79 = por %p77, %p78
    %p80 = scmp.ne.s32.totalorder %s71, %s72
    %p81 = scmp.eq.s32.totalorder %s19, 0
    %p82 = por %p80, %p81
    %p83 = scmp.ne.s32.totalorder %s71, %s72
    %p84 = scmp.eq.s32.totalorder %s20, 2
    %p85 = por %p83, %p84
    %p87 = scmp.ne.s32.totalorder %s72, %s86
    %p88 = scmp.eq.s32.totalorder %s20, 0
    %p89 = por %p87, %p88
    %s91 = sadd.s32 %s90, 1
    %p94 = scmp.eq.s32.totalorder %s14, 2
    %p95 = scmp.ne.s32.totalorder %s90, %s92
    %p96 = scmp.eq.s32.totalorder %s14, 0
    %p97 = por %p95, %p96
    %p98 = scmp.ne.s32.totalorder %s90, %s92
    %p99 = scmp.eq.s32.totalorder %s19, 2
    %p100 = por %p98, %p99
    %p101 = scmp.ne.s32.totalorder %s92, %s93
    %p102 = scmp.eq.s32.totalorder %s19, 0
    %p103 = por %p101, %p102
    %p104 = scmp.ne.s32.totalorder %s92, %s93
    %p105 = scmp.eq.s32.totalorder %s20, 2
    %p106 = por %p104, %p105
    %p108 = scmp.ne.s32.totalorder %s93, %s107
    %p109 = scmp.eq.s32.totalorder %s20, 0
    %p110 = por %p108, %p109
    %s112 = sadd.s32 %s111, 1
    %p115 = scmp.eq.s32.totalorder %s14, 2
    %p116 = scmp.ne.s32.totalorder %s111, %s113
    %p117 = scmp.eq.s32.totalorder %s14, 0
    %p118 = por %p116, %p117
    %p119 = scmp.ne.s32.totalorder %s111, %s113
    %p120 = scmp.eq.s32.totalorder %s19, 2
    %p121 = por %p119, %p120
    %p122 = scmp.ne.s32.totalorder %s113, %s114
    %p123 = scmp.eq.s32.totalorder %s19, 0
    %p124 = por %p122, %p123
    %p125 = scmp.ne.s32.totalorder %s113, %s114
    %p126 = scmp.eq.s32.totalorder %s20, 2
    %p127 = por %p125, %p126
    %p129 = scmp.ne.s32.totalorder %s114, %s128
    %p130 = scmp.eq.s32.totalorder %s20, 0
    %p131 = por %p129, %p130
    %s133 = sadd.s32 %s132, 1
    %p136 = scmp.eq.s32.totalorder %s14, 2
    %p137 = scmp.ne.s32.totalorder %s132, %s134
    %p138 = scmp.eq.s32.totalorder %s14, 0
    %p139 = por %p137, %p138
    %p140 = scmp.ne.s32.totalorder %s132, %s134
    %p141 = scmp.eq.s32.totalorder %s19, 2
    %p142 = por %p140, %p141
    %p143 = scmp.ne.s32.totalorder %s134, %s135
    %p144 = scmp.eq.s32.totalorder %s19, 0
    %p145 = por %p143, %p144
    %p146 = scmp.ne.s32.totalorder %s134, %s135
    %p147 = scmp.eq.s32.totalorder %s20, 2
    %p148 = por %p146, %p147
    %p150 = scmp.ne.s32.totalorder %s135, %s149
    %p151 = scmp.eq.s32.totalorder %s20, 0
    %p152 = por %p150, %p151
    %s154 = sadd.s32 %s153, 1
    %p157 = scmp.eq.s32.totalorder %s14, 2
    %p158 = scmp.ne.s32.totalorder %s153, %s155
    %p159 = scmp.eq.s32.totalorder %s14, 0
    %p160 = por %p158, %p159
    %p161 = scmp.ne.s32.totalorder %s153, %s155
    %p162 = scmp.eq.s32.totalorder %s19, 2
    %p163 = por %p161, %p162
    %p164 = scmp.ne.s32.totalorder %s155, %s156
    %p165 = scmp.eq.s32.totalorder %s19, 0
    %p166 = por %p164, %p165
    %p167 = scmp.ne.s32.totalorder %s155, %s156
    %p168 = scmp.eq.s32.totalorder %s20, 2
    %p169 = por %p167, %p168
    %p171 = scmp.ne.s32.totalorder %s156, %s170
    %p172 = scmp.eq.s32.totalorder %s20, 0
    %p173 = por %p171, %p172
    %s174 = ssub.s32 %s14, %s21
    %p175 = scmp.eq.s32.totalorder %s174, 0
    %s177 = sadd.s32 %s176, 1
    %s178 = scalar_select %p175, %s176, %s177
    %p181 = pneg %p175
    %p182 = scmp.eq.s32.totalorder %s14, 2
    %p183 = por %p181, %p182
    %p184 = scmp.ne.s32.totalorder %s176, %s179
    %p185 = scmp.eq.s32.totalorder %s14, 0
    %p186 = por %p184, %p185
    %p187 = scmp.ne.s32.totalorder %s176, %s179
    %p188 = scmp.eq.s32.totalorder %s19, 2
    %p189 = por %p187, %p188
    %p190 = scmp.ne.s32.totalorder %s179, %s180
    %p191 = scmp.eq.s32.totalorder %s19, 0
    %p192 = por %p190, %p191
    %p193 = scmp.ne.s32.totalorder %s179, %s180
    %p194 = scmp.eq.s32.totalorder %s20, 2
    %p195 = por %p193, %p194
    %p197 = scmp.ne.s32.totalorder %s180, %s196
    %p198 = scmp.eq.s32.totalorder %s20, 0
    %p199 = por %p197, %p198
    %s200 = ssub.s32 %s14, %s21
    %p201 = scmp.eq.s32.totalorder %s200, 0
    %s203 = sadd.s32 %s202, 1
    %s204 = scalar_select %p201, %s202, %s203
    %p207 = pneg %p201
    %p208 = scmp.eq.s32.totalorder %s14, 2
    %p209 = por %p207, %p208
    %p210 = scmp.ne.s32.totalorder %s202, %s205
    %p211 = scmp.eq.s32.totalorder %s14, 0
    %p212 = por %p210, %p211
    %p213 = scmp.ne.s32.totalorder %s202, %s205
    %p214 = scmp.eq.s32.totalorder %s19, 2
    %p215 = por %p213, %p214
    %p216 = scmp.ne.s32.totalorder %s205, %s206
    %p217 = scmp.eq.s32.totalorder %s19, 0
    %p218 = por %p216, %p217
    %p219 = scmp.ne.s32.totalorder %s205, %s206
    %p220 = scmp.eq.s32.totalorder %s20, 2
    %p221 = por %p219, %p220
    %p223 = scmp.ne.s32.totalorder %s206, %s222
    %p224 = scmp.eq.s32.totalorder %s20, 0
    %p225 = por %p223, %p224
    %p226 = scmp.le.s32.totalorder 1, %s14
    %p227 = scmp.lt.s32.totalorder %s14, 4
    %p228 = pnand %p226, %p227
    %p229 = pneg %p228
    // Predicated region
    $region9: #{_forward_impl.1} parent=5 // pred_check
      _
    $region10: #{_forward_impl.1} parent=5 // pred_check_branch
      %231 = sbr.rel (%p228) target = $region12
    $region11: #{_forward_impl.1} parent=5 // pred_region
      %s232 = ssub.s32 %s14, 1
      // Predicated region
      $region13: #{_forward_impl.1} parent=11 // pred_check
        %p233 = pneg %p61
      $region14: #{_forward_impl.1} parent=11 // pred_check_branch
        %235 = sbr.rel (%p233) target = $region16
      $region15: #{_forward_impl.1} parent=11 // pred_region
        _
      $region16: #{_forward_impl.1} parent=11 // pred_fallthru
        _
      // Predicated region
      $region17: #{_forward_impl.1} parent=11 // pred_check
        %p236 = pneg %p82
      $region18: #{_forward_impl.1} parent=11 // pred_check_branch
        %238 = sbr.rel (%p236) target = $region20
      $region19: #{_forward_impl.1} parent=11 // pred_region
        _
      $region20: #{_forward_impl.1} parent=11 // pred_fallthru
        _
      // Predicated region
      $region21: #{_forward_impl.1} parent=11 // pred_check
        %p239 = pneg %p103
      $region22: #{_forward_impl.1} parent=11 // pred_check_branch
        %241 = sbr.rel (%p239) target = $region24
      $region23: #{_forward_impl.1} parent=11 // pred_region
        _
      $region24: #{_forward_impl.1} parent=11 // pred_fallthru
        _
      // Predicated region
      $region25: #{_forward_impl.1} parent=11 // pred_check
        %p242 = pneg %p124
      $region26: #{_forward_impl.1} parent=11 // pred_check_branch
        %244 = sbr.rel (%p242) target = $region28
      $region27: #{_forward_impl.1} parent=11 // pred_region
        _
      $region28: #{_forward_impl.1} parent=11 // pred_fallthru
        _
      // Predicated region
      $region29: #{_forward_impl.1} parent=11 // pred_check
        %p245 = pneg %p145
      $region30: #{_forward_impl.1} parent=11 // pred_check_branch
        %247 = sbr.rel (%p245) target = $region32
      $region31: #{_forward_impl.1} parent=11 // pred_region
        _
      $region32: #{_forward_impl.1} parent=11 // pred_fallthru
        _
      // Predicated region
      $region33: #{_forward_impl.1} parent=11 // pred_check
        %p248 = pneg %p166
      $region34: #{_forward_impl.1} parent=11 // pred_check_branch
        %250 = sbr.rel (%p248) target = $region36
      $region35: #{_forward_impl.1} parent=11 // pred_region
        _
      $region36: #{_forward_impl.1} parent=11 // pred_fallthru
        _
    $region12: #{_forward_impl.1} parent=5 // pred_fallthru
      _
    %p251 = scmp.lt.s32.totalorder %s14, 3
    // Predicated region
    $region37: #{_forward_impl.1} parent=5 // pred_check
      %p252 = pneg %p251
    $region38: #{_forward_impl.1} parent=5 // pred_check_branch
      %254 = sbr.rel (%p252) target = $region40
    $region39: #{_forward_impl.1} parent=5 // pred_region
      // Predicated region
      $region41: #{_forward_impl.1} parent=39 // pred_check
        %p255 = pneg %p34
      $region42: #{_forward_impl.1} parent=39 // pred_check_branch
        %257 = sbr.rel (%p255) target = $region44
      $region43: #{_forward_impl.1} parent=39 // pred_region
        %s258 = smul.u32 4, %s14
        %p259 = scmp.lt.s32.totalorder %s258, 11
        %s260 = scalar_select %p259, %s258, 11
        %s261 = smul.addr %s260, 8
        %s262 = scalar_lea.vmem %s0, %s261
        %s263 = smul.u32 4, %s14
      $region44: #{_forward_impl.1} parent=39 // pred_fallthru
        _
      // Predicated region
      $region45: #{_forward_impl.1} parent=39 // pred_check
        %p264 = pneg %p186
      $region46: #{_forward_impl.1} parent=39 // pred_check_branch
        %266 = sbr.rel (%p264) target = $region48
      $region47: #{_forward_impl.1} parent=39 // pred_region
        %s267 = smul.u32 4, %s14
        %p268 = scmp.lt.s32.totalorder %s267, 11
        %s269 = scalar_select %p268, %s267, 11
        %s270 = smul.addr %s269, 4
        %s271 = scalar_lea.vmem %s7, %s270
        %s272 = smul.u32 4, %s14
      $region48: #{_forward_impl.1} parent=39 // pred_fallthru
        _
    $region40: #{_forward_impl.1} parent=5 // pred_fallthru
      _
    %p273 = scmp.le.s32.totalorder 1, %s14
    %p274 = scmp.lt.s32.totalorder %s14, 4
    %p275 = pnand %p273, %p274
    %p276 = pneg %p275
    // Predicated region
    $region49: #{_forward_impl.1} parent=5 // pred_check
      _
    $region50: #{_forward_impl.1} parent=5 // pred_check_branch
      %278 = sbr.rel (%p275) target = $region52
    $region51: #{_forward_impl.1} parent=5 // pred_region
      %s279 = ssub.s32 %s14, 1
      %s280 = smul.u32 4, %s19
      %p281 = scmp.lt.s32.totalorder %s280, 11
      %s282 = scalar_select %p281, %s280, 11
      %s283 = smul.addr %s282, 8
      %s284 = scalar_lea.vmem %s0, %s283
      %p285 = pneg %p40
      %p286 = pneg %p37
      %p287 = pneg %p61
      %p288 = pneg %p58
      %p289 = pneg %p82
      %p290 = pneg %p79
      %p291 = pneg %p103
      %p292 = pneg %p100
      %p293 = pneg %p124
      %p294 = pneg %p121
      %p295 = pneg %p145
      %p296 = pneg %p142
      %p297 = pneg %p166
      %p298 = pneg %p163
      %s299 = smul.u32 4, %s19
      %p300 = scmp.lt.s32.totalorder %s299, 11
      %s301 = scalar_select %p300, %s299, 11
      %s302 = smul.addr %s301, 4
      %s303 = scalar_lea.vmem %s7, %s302
      %p304 = pneg %p192
      %p305 = pneg %p189
      %p306 = pneg %p218
      %p307 = pneg %p215
      %s308 = smul.u32 4, %s19
      %p309 = scmp.lt.s32.totalorder %s308, 11
      %s310 = scalar_select %p309, %s308, 11
      %s311 = smul.addr %s310, 8
      %s312 = scalar_lea.vmem %s8, %s311
      %s313 = smul.u32 4, %s19
      %p314 = scmp.lt.s32.totalorder %s313, 11
      %s315 = scalar_select %p314, %s313, 11
      %s316 = smul.addr %s315, 8
      %s317 = scalar_lea.vmem %s0, %s316
      %s318 = smul.u32 4, %s19
      %s319 = smul.u32 4, %s19
      %p320 = scmp.lt.s32.totalorder %s319, 11
      %s321 = scalar_select %p320, %s319, 11
      %s322 = smul.addr %s321, 4
      %s323 = scalar_lea.vmem %s7, %s322
      %s324 = smul.u32 4, %s19
      %s325 = smul.u32 4, %s19
      %p326 = scmp.lt.s32.totalorder %s325, 11
      %s327 = scalar_select %p326, %s325, 11
      %s328 = smul.addr %s327, 8
      %s329 = scalar_lea.vmem %s8, %s328
      %s330 = smul.u32 4, %s19
      %v331 = vld [vmem:[%s317] sm:$0xff]
      %v332 = vld [vmem:[%s317 + $0x8] sm:$0xff]
      %v333 = vld [vmem:[%s317 + $0x10] sm:$0xff]
      %v334 = vld [vmem:[%s317 + $0x18] sm:$0xff]
      %v335 = vld [vmem:[%s1] sm:$0xff]
      %v336 = vld [vmem:[%s1 + $0x8] sm:$0xff]
      %v337 = vld [vmem:[%s1 + $0x10] sm:$0xff]
      %v338 = vld [vmem:[%s1 + $0x18] sm:$0xff]
      %v339 = vld [vmem:[%s2] sm:$0x1]
      %v341 = vperm.slane %v339, 0
      %vm343 = vcmask 261120
      %v345 = vsel %vm343, %v331, 0
      %v348 = vsel %vm343, %v332, 0
      %v351 = vsel %vm343, %v333, 0
      %v354 = vsel %vm343, %v334, 0
      %356 = vmatpush.msra.mxu0 0.0
      %357 = vmatpush.msra.mxu0 0.0
      %358 = vmatpush.msra.mxu0 0.0
      %359 = vmatpush.msra.mxu0 0.0
      %360 = vmatpush.msra.mxu0 0.0
      %361 = vmatpush.msra.mxu0 0.0
      %362 = vmatpush.msra.mxu0 0.0
      %363 = vmatpush.msra.mxu0 0.0
      %364 = vmatpush.msra.mxu0 0.0
      %365 = vmatpush.msra.mxu0 0.0
      %366 = vmatpush.msra.mxu0 0.0
      %367 = vmatpush.msra.mxu0 0.0
      %368 = vmatpush.msra.mxu0 %v338
      %369 = vmatpush.msra.mxu0 %v337
      %370 = vmatpush.msra.mxu0 %v336
      %371 = vmatpush.msra.mxu0 %v335
      %372 = vmatmul.f32.gmra.mxu0 %v345
      %v373 = vpop.f32.mrf.mxu0
      %v374 = vadd.f32 %v341, %v373
      %375 = vmatmul.f32.gmra.mxu0 %v348
      %v376 = vpop.f32.mrf.mxu0
      %v377 = vadd.f32 %v341, %v376
      %378 = vmatmul.f32.gmra.mxu0 %v351
      %v379 = vpop.f32.mrf.mxu0
      %v380 = vadd.f32 %v341, %v379
      %381 = vmatmul.f32.gmra.mxu0 %v354
      %v382 = vpop.f32.mrf.mxu0
      %v383 = vadd.f32 %v341, %v382
      %384 = vdwg.mxu0
      %v385 = vmax.f32 %v374, 0.0
      %v386 = vmax.f32 %v377, 0.0
      %v387 = vmax.f32 %v380, 0.0
      %v388 = vmax.f32 %v383, 0.0
      %v389 = vld [vmem:[%s3] sm:$0xff]
      %v390 = vld [vmem:[%s3 + $0x8] sm:$0xff]
      %v391 = vld [vmem:[%s3 + $0x10] sm:$0xff]
      %v392 = vld [vmem:[%s3 + $0x18] sm:$0xff]
      %v393 = vld [vmem:[%s3 + $0x20] sm:$0xff]
      %v394 = vld [vmem:[%s3 + $0x28] sm:$0xff]
      %v395 = vld [vmem:[%s3 + $0x30] sm:$0xff]
      %v396 = vld [vmem:[%s3 + $0x38] sm:$0xff]
      %v397 = vld [vmem:[%s3 + $0x40] sm:$0xff]
      %v398 = vld [vmem:[%s3 + $0x48] sm:$0xff]
      %v399 = vld [vmem:[%s3 + $0x50] sm:$0xff]
      %v400 = vld [vmem:[%s3 + $0x58] sm:$0xff]
      %v401 = vld [vmem:[%s3 + $0x60] sm:$0xff]
      %v402 = vld [vmem:[%s3 + $0x68] sm:$0xff]
      %v403 = vld [vmem:[%s3 + $0x70] sm:$0xff]
      %v404 = vld [vmem:[%s3 + $0x78] sm:$0xff]
      %v405 = vld [vmem:[%s4] sm:$0x1]
      %v407 = vperm.slane %v405, 0
      %409 = vmatpush.msra.mxu0 %v404
      %410 = vmatpush.msra.mxu0 %v403
      %411 = vmatpush.msra.mxu0 %v402
      %412 = vmatpush.msra.mxu0 %v401
      %413 = vmatpush.msra.mxu0 %v400
      %414 = vmatpush.msra.mxu0 %v399
      %415 = vmatpush.msra.mxu0 %v398
      %416 = vmatpush.msra.mxu0 %v397
      %417 = vmatpush.msra.mxu0 %v396
      %418 = vmatpush.msra.mxu0 %v395
      %419 = vmatpush.msra.mxu0 %v394
      %420 = vmatpush.msra.mxu0 %v393
      %421 = vmatpush.msra.mxu0 %v392
      %422 = vmatpush.msra.mxu0 %v391
      %423 = vmatpush.msra.mxu0 %v390
      %424 = vmatpush.msra.mxu0 %v389
      %425 = vmatmul.f32.gmra.mxu0 %v385
      %v426 = vpop.f32.mrf.mxu0
      %v427 = vadd.f32 %v407, %v426
      %428 = vmatmul.f32.gmra.mxu0 %v386
      %v429 = vpop.f32.mrf.mxu0
      %v430 = vadd.f32 %v407, %v429
      %431 = vmatmul.f32.gmra.mxu0 %v387
      %v432 = vpop.f32.mrf.mxu0
      %v433 = vadd.f32 %v407, %v432
      %434 = vmatmul.f32.gmra.mxu0 %v388
      %v435 = vpop.f32.mrf.mxu0
      %v436 = vadd.f32 %v407, %v435
      %437 = vdwg.mxu0
      %v438 = vmax.f32 %v427, 0.0
      %v439 = vmax.f32 %v430, 0.0
      %v440 = vmax.f32 %v433, 0.0
      %v441 = vmax.f32 %v436, 0.0
      %v442 = vld [vmem:[%s5] sm:$0xff]
      %v443 = vld [vmem:[%s5 + $0x8] sm:$0xff]
      %v444 = vld [vmem:[%s5 + $0x10] sm:$0xff]
      %v445 = vld [vmem:[%s5 + $0x18] sm:$0xff]
      %v446 = vld [vmem:[%s5 + $0x20] sm:$0xff]
      %v447 = vld [vmem:[%s5 + $0x28] sm:$0xff]
      %v448 = vld [vmem:[%s5 + $0x30] sm:$0xff]
      %v449 = vld [vmem:[%s5 + $0x38] sm:$0xff]
      %v450 = vld [vmem:[%s5 + $0x40] sm:$0xff]
      %v451 = vld [vmem:[%s5 + $0x48] sm:$0xff]
      %v452 = vld [vmem:[%s5 + $0x50] sm:$0xff]
      %v453 = vld [vmem:[%s5 + $0x58] sm:$0xff]
      %v454 = vld [vmem:[%s5 + $0x60] sm:$0xff]
      %v455 = vld [vmem:[%s5 + $0x68] sm:$0xff]
      %v456 = vld [vmem:[%s5 + $0x70] sm:$0xff]
      %v457 = vld [vmem:[%s5 + $0x78] sm:$0xff]
      %v458 = vld [vmem:[%s6] sm:$0x1]
      %v460 = vperm.slane %v458, 0
      %462 = vmatpush.msra.mxu0 %v457
      %463 = vmatpush.msra.mxu0 %v456
      %464 = vmatpush.msra.mxu0 %v455
      %465 = vmatpush.msra.mxu0 %v454
      %466 = vmatpush.msra.mxu0 %v453
      %467 = vmatpush.msra.mxu0 %v452
      %468 = vmatpush.msra.mxu0 %v451
      %469 = vmatpush.msra.mxu0 %v450
      %470 = vmatpush.msra.mxu0 %v449
      %471 = vmatpush.msra.mxu0 %v448
      %472 = vmatpush.msra.mxu0 %v447
      %473 = vmatpush.msra.mxu0 %v446
      %474 = vmatpush.msra.mxu0 %v445
      %475 = vmatpush.msra.mxu0 %v444
      %476 = vmatpush.msra.mxu0 %v443
      %477 = vmatpush.msra.mxu0 %v442
      %478 = vmatmul.f32.gmra.mxu0 %v438
      %v479 = vpop.f32.mrf.mxu0
      %v480 = vadd.f32 %v460, %v479
      %481 = vmatmul.f32.gmra.mxu0 %v439
      %v482 = vpop.f32.mrf.mxu0
      %v483 = vadd.f32 %v460, %v482
      %484 = vmatmul.f32.gmra.mxu0 %v440
      %v485 = vpop.f32.mrf.mxu0
      %v486 = vadd.f32 %v460, %v485
      %487 = vmatmul.f32.gmra.mxu0 %v441
      %v488 = vpop.f32.mrf.mxu0
      %v489 = vadd.f32 %v460, %v488
      %490 = vdwg.mxu0
      %v491 = vlaneseq
      %v492 = vand.u32 %v491, 127
      %vm493 = vcmp.lt.s32.totalorder %v492, 16
      %v494 = vsel %vm493, %v480, -1e+09
      %v495 = vsel %vm493, %v483, -1e+09
      %v496 = vsel %vm493, %v486, -1e+09
      %v497 = vsel %vm493, %v489, -1e+09
      %v498 = vld [vmem:[%s323] sm:$0xf]
      %v499 = vld [vmem:[%s323 + $0x4] sm:$0xf]
      %v500 = vld [vmem:[%s323 + $0x8] sm:$0xf]
      %v501 = vld [vmem:[%s323 + $0xc] sm:$0xf]
      %v502 = vunpack.c.l.bf16 %v498
      %v503 = vunpack.c.l.bf16 %v499
      %v504 = vunpack.c.l.bf16 %v500
      %v505 = vunpack.c.l.bf16 %v501
      %v506 = vadd.f32 %v494, %v502
      %v507 = vadd.f32 %v495, %v503
      %v508 = vadd.f32 %v496, %v504
      %v509 = vadd.f32 %v497, %v505
      %510 = vmax.xlane.f32.xlu0 %v506
      %v511 = vpop.xlane.xlu0 %510
      %512 = vmax.xlane.f32.xlu0 %v507
      %v513 = vpop.xlane.xlu0 %512
      %514 = vmax.xlane.f32.xlu0 %v508
      %v515 = vpop.xlane.xlu0 %514
      %516 = vmax.xlane.f32.xlu0 %v509
      %v517 = vpop.xlane.xlu0 %516
      %v518 = vsub.f32 %v506, %v511
      %v519 = vsub.f32 %v507, %v513
      %v520 = vsub.f32 %v508, %v515
      %v521 = vsub.f32 %v509, %v517
      %v522 = vmul.f32 %v518, 1.442695
      %v523 = vpow.pop %v522
      %v524 = vmul.f32 %v519, 1.442695
      %v525 = vpow.pop %v524
      %v526 = vmul.f32 %v520, 1.442695
      %v527 = vpow.pop %v526
      %v528 = vmul.f32 %v521, 1.442695
      %v529 = vpow.pop %v528
      %530 = vadd.xlane.f32.xlu0 %v523
      %v531 = vpop.xlane.xlu0 %530
      %532 = vadd.xlane.f32.xlu0 %v525
      %v533 = vpop.xlane.xlu0 %532
      %534 = vadd.xlane.f32.xlu0 %v527
      %v535 = vpop.xlane.xlu0 %534
      %536 = vadd.xlane.f32.xlu0 %v529
      %v537 = vpop.xlane.xlu0 %536
      %v538 = vrcp.pop %v531
      %v539 = vrcp.pop %v533
      %v540 = vrcp.pop %v535
      %v541 = vrcp.pop %v537
      %v542 = vmul.f32 %v523, %v538
      %v543 = vmul.f32 %v525, %v539
      %v544 = vmul.f32 %v527, %v540
      %v545 = vmul.f32 %v529, %v541
      %vm546 = vcmp.eq.s32.totalorder %v492, 16
      %v547 = vsel %vm546, %v480, %v542
      %v548 = vsel %vm546, %v483, %v543
      %v549 = vsel %vm546, %v486, %v544
      %v550 = vsel %vm546, %v489, %v545
      %551 = vst [vmem:[%s329] sm:$0xff] %v547
      %552 = vst [vmem:[%s329 + $0x8] sm:$0xff] %v548
      %553 = vst [vmem:[%s329 + $0x10] sm:$0xff] %v549
      %554 = vst [vmem:[%s329 + $0x18] sm:$0xff] %v550
      %s555 = smul.u32 4, %s19
      %p556 = scmp.lt.s32.totalorder %s555, 11
      %s557 = scalar_select %p556, %s555, 11
      %s558 = smul.addr %s557, 8
      %s559 = scalar_lea.vmem %s8, %s558
      // Predicated region
      $region53: #{_forward_impl.1} parent=51 // pred_check
        %p560 = pneg %p215
      $region54: #{_forward_impl.1} parent=51 // pred_check_branch
        %562 = sbr.rel (%p560) target = $region56
      $region55: #{_forward_impl.1} parent=51 // pred_region
        %s563 = smul.u32 4, %s19
      $region56: #{_forward_impl.1} parent=51 // pred_fallthru
        _
    $region52: #{_forward_impl.1} parent=5 // pred_fallthru
      _
    %p564 = scmp.le.s32.totalorder 2, %s14
    // Predicated region
    $region57: #{_forward_impl.1} parent=5 // pred_check
      %p565 = pneg %p564
    $region58: #{_forward_impl.1} parent=5 // pred_check_branch
      %567 = sbr.rel (%p565) target = $region60
    $region59: #{_forward_impl.1} parent=5 // pred_region
      %s568 = ssub.s32 %s14, 2
      // Predicated region
      $region61: #{_forward_impl.1} parent=59 // pred_check
        %p569 = pneg %p221
      $region62: #{_forward_impl.1} parent=59 // pred_check_branch
        %571 = sbr.rel (%p569) target = $region64
      $region63: #{_forward_impl.1} parent=59 // pred_region
        %s572 = smul.u32 4, %s20
        %p573 = scmp.lt.s32.totalorder %s572, 11
        %s574 = scalar_select %p573, %s572, 11
        %s575 = smul.addr %s574, 8
        %s576 = scalar_lea.vmem %s8, %s575
      $region64: #{_forward_impl.1} parent=59 // pred_fallthru
        _
    $region60: #{_forward_impl.1} parent=5 // pred_fallthru
      _
  $region6: #{_forward_impl.1} parent=0 // loop_footer
    %s18 = sadd.s32 1, %s14
  $region7: #{_forward_impl.1} parent=0 // loop_footer_branch
    %13 = sbr.rel target = $region3
  $region8: #{_forward_impl.1} parent=0 // loop_exit
    _

</llo_original>
